<compile_context>
chip_gen: v5e
topology: v5e:2x2
jax: 0.10.0
libtpu: 0.0.40
codegen_flags: <defaults>
</compile_context>

<pallas_src>
import functools

import jax
import jax.numpy as jnp
from jax.experimental import pallas as pl
from jax.experimental.pallas import tpu as pltpu


def _round_up(x, m):
    return ((x + m - 1) // m) * m


# --------------------------------------------------------------------------
# Shared epilogue: bias add -> LayerNorm -> ReLU (f32 in, out_dtype handled
# by caller). Padded output columns are masked out of the LN statistics.
# --------------------------------------------------------------------------
def _ln_relu_epilogue(y, params, eps, o_real, o_pad):
    bias = params[0:1, :]
    gamma = params[1:2, :]
    beta = params[2:3, :]
    y = y + bias
    inv_o = 1.0 / o_real
    if o_pad != o_real:
        col = jax.lax.broadcasted_iota(jnp.int32, y.shape, dimension=1)
        mask = col < o_real
        y = jnp.where(mask, y, 0.0)
        u = jnp.sum(y, axis=-1, keepdims=True) * inv_o
        c = jnp.where(mask, y - u, 0.0)
    else:
        u = jnp.sum(y, axis=-1, keepdims=True) * inv_o
        c = y - u
    s = jnp.sum(c * c, axis=-1, keepdims=True) * inv_o   # biased variance
    n = c * jax.lax.rsqrt(s + eps)                        # rsqrt -> EUP slot
    out = gamma * n + beta
    return jnp.maximum(out, 0.0)


# --------------------------------------------------------------------------
# Kernel A: weight fully resident in VMEM; 1-D grid over row tiles.
# --------------------------------------------------------------------------
def _mlp_kernel_resident(x_ref, w_ref, p_ref, o_ref, *, eps, o_real, o_pad):
    x = x_ref[...].astype(jnp.bfloat16)                   # cast rides the VPU
    y = jnp.dot(x, w_ref[...], preferred_element_type=jnp.float32)
    out = _ln_relu_epilogue(y, p_ref[...], eps, o_real, o_pad)
    o_ref[...] = out.astype(o_ref.dtype)


# --------------------------------------------------------------------------
# Kernel B: streamed W tiles; 2-D grid (row tiles, K tiles), f32 accumulator.
# --------------------------------------------------------------------------
def _mlp_kernel_streamed(x_ref, w_ref, p_ref, o_ref, acc_ref,
                         *, eps, o_real, o_pad):
    k = pl.program_id(1)
    part = jnp.dot(x_ref[...].astype(jnp.bfloat16), w_ref[...],
                   preferred_element_type=jnp.float32)

    @pl.when(k == 0)
    def _():
        acc_ref[...] = part          # direct store: no zero-init pass

    @pl.when(k > 0)
    def _():
        acc_ref[...] += part

    @pl.when(k == pl.num_programs(1) - 1)
    def _():
        out = _ln_relu_epilogue(acc_ref[...], p_ref[...], eps, o_real, o_pad)
        o_ref[...] = out.astype(o_ref.dtype)


# --------------------------------------------------------------------------
# Generation / VMEM queries (robust to API drift).
# --------------------------------------------------------------------------
def _device_info():
    vmem_cap = None
    try:
        info = pltpu.get_tpu_info()
        for attr in ("vmem_capacity_bytes", "vmem_bytes", "vmem_size_bytes"):
            v = getattr(info, attr, None)
            if v:
                vmem_cap = int(v)
                break
    except Exception:
        pass
    if vmem_cap is None:
        vmem_cap = 64 * 1024 * 1024    # conservative (v7x per-TC)
    kind = ""
    try:
        kind = jax.devices()[0].device_kind.lower()
    except Exception:
        pass
    is_v5e = ("v5 lite" in kind) or ("v5e" in kind) or ("v5litepod" in kind)
    return vmem_cap, is_v5e


def _streamed_footprint(tm, tk, o_pad, x_item, out_item):
    return (2 * tm * tk * x_item        # x tiles (double-buffered, orig dtype)
            + 2 * tk * o_pad * 2        # bf16 W tiles
            + 2 * tm * o_pad * out_item # output tiles
            + tm * o_pad * 4            # f32 accumulator
            + 2 * 8 * o_pad * 4)        # packed params (3,O_pad) -> 8 sublanes


def _resident_footprint(tm, h_pad, o_pad, x_item, out_item):
    return (2 * h_pad * o_pad * 2       # resident bf16 W (count 2x for safety)
            + 2 * tm * h_pad * x_item   # x row tiles
            + 2 * tm * o_pad * out_item
            + 2 * 8 * o_pad * 4)


# --------------------------------------------------------------------------
# Wrapper.
# --------------------------------------------------------------------------
def mlp_forward(x, weight, bias, gamma, beta, *, eps=1e-5,
                tile_m=None, tile_k=None, out_dtype=None):
    """Fused Linear -> LayerNorm -> ReLU.

    x: [..., H]   weight: [H, O]   bias/gamma/beta: [O]   ->  [..., O]
    """
    orig_shape = x.shape
    H = orig_shape[-1]
    O = weight.shape[1]
    x2 = x.reshape(-1, H)
    N = x2.shape[0]
    out_dtype = x.dtype if out_dtype is None else out_dtype

    x_item = jnp.dtype(x.dtype).itemsize
    out_item = jnp.dtype(out_dtype).itemsize

    vmem_cap, is_v5e = _device_info()
    budget = int(0.7 * vmem_cap)

    # ---- lane-dense / MXU padding of the feature dims --------------------
    H_pad = _round_up(H, 128)
    O_pad = _round_up(O, 128)

    # ---- tile_m from the W-reuse roofline --------------------------------
    if tile_m is None:
        tm_cap = 256 if is_v5e else 512        # v5e: don't inflate vld/vst load
        if N >= 512:
            tile_m = min(512, tm_cap)
        elif N >= 256:
            tile_m = 256
        elif N >= 128:
            tile_m = 128
        else:
            tile_m = _round_up(max(N, 1), 16)  # bf16 sublane packing

    # ---- tile_k candidates + VMEM-budget auto-shrink ----------------------
    tk_cands = [c for c in (1024, 512, 256, 128) if H_pad % c == 0]
    tm_cands = sorted({t for t in (512, 256, 128, 64, 32, 16) if t <= tile_m}
                      | {tile_m}, reverse=True)

    chosen = None
    for tm in tm_cands:
        for tk in ([tile_k] if tile_k is not None else tk_cands):
            if H_pad % tk != 0:
                continue
            if _streamed_footprint(tm, tk, O_pad, x_item, out_item) <= budget:
                chosen = (tm, tk)
                break
        if chosen is not None:
            break
    if chosen is None:                      # extreme O_pad: fall back to minimum
        chosen = (min(tm_cands), tile_k if tile_k is not None else 128)
    tile_m, tile_k = chosen

    N_pad = _round_up(N, tile_m)

    # ---- W-resident variant? (eliminates per-row-tile HBM re-read of W) ---
    w_bytes = H_pad * O_pad * 2
    resident_fp = _resident_footprint(tile_m, H_pad, O_pad, x_item, out_item)
    use_resident = (N_pad // tile_m >= 1
                    and w_bytes <= min(48 * 1024 * 1024, budget // 3)
                    and resident_fp <= budget)

    # ---- operand prep (no wrapper pad/cast of x unless shape requires) ----
    xp = x2
    if N_pad != N or H_pad != H:
        xp = jnp.pad(x2, ((0, N_pad - N), (0, H_pad - H)))
    wp = weight.astype(jnp.bfloat16)        # W is re-read -> pre-cast once
    if H_pad != H or O_pad != O:
        wp = jnp.pad(wp, ((0, H_pad - H), (0, O_pad - O)))

    def _pad1(v):
        v = v.astype(jnp.float32)
        return jnp.pad(v, (0, O_pad - O)) if O_pad != O else v

    params = jnp.stack([_pad1(bias), _pad1(gamma), _pad1(beta)], axis=0)

    n_row_tiles = N_pad // tile_m

    if use_resident:
        footprint = resident_fp
        grid = (n_row_tiles,)
        kernel = functools.partial(_mlp_kernel_resident, eps=float(eps),
                                   o_real=O, o_pad=O_pad)
        in_specs = [
            pl.BlockSpec((tile_m, H_pad), lambda i: (i, 0)),   # x row tile
            pl.BlockSpec((H_pad, O_pad), lambda i: (0, 0)),    # resident W
            pl.BlockSpec((3, O_pad), lambda i: (0, 0)),        # bias/gamma/beta
        ]
        out_specs = pl.BlockSpec((tile_m, O_pad), lambda i: (i, 0))
        scratch_shapes = []
        dim_sem = ("parallel",)
        w_reads = 1
    else:
        footprint = _streamed_footprint(tile_m, tile_k, O_pad, x_item, out_item)
        grid = (n_row_tiles, H_pad // tile_k)
        kernel = functools.partial(_mlp_kernel_streamed, eps=float(eps),
                                   o_real=O, o_pad=O_pad)
        in_specs = [
            pl.BlockSpec((tile_m, tile_k), lambda i, k: (i, k)),  # x tile
            pl.BlockSpec((tile_k, O_pad), lambda i, k: (k, 0)),   # W tile
            pl.BlockSpec((3, O_pad), lambda i, k: (0, 0)),        # params
        ]
        out_specs = pl.BlockSpec((tile_m, O_pad), lambda i, k: (i, 0))
        scratch_shapes = [pltpu.VMEM((tile_m, O_pad), jnp.float32)]
        dim_sem = ("parallel", "arbitrary")
        w_reads = n_row_tiles

    # vmem limit derived from actual buffers (+25% headroom), never physical cap.
    vmem_limit = max(32 * 1024 * 1024,
                     min(int(footprint * 1.25) + (2 << 20),
                         int(0.85 * vmem_cap)))

    cost = pl.CostEstimate(
        flops=2 * N_pad * H_pad * O_pad,
        transcendentals=N_pad,                         # one rsqrt per row
        bytes_accessed=(xp.size * x_item               # activations, read once
                        + wp.size * 2 * w_reads        # bf16 weight reads
                        + params.size * 4
                        + N_pad * O_pad * out_item),   # output writeback
    )

    out = pl.pallas_call(
        kernel,
        out_shape=jax.ShapeDtypeStruct((N_pad, O_pad), out_dtype),
        grid_spec=pltpu.PrefetchScalarGridSpec(
            num_scalar_prefetch=0,
            grid=grid,
            in_specs=in_specs,
            out_specs=out_specs,
            scratch_shapes=scratch_shapes,
        ),
        compiler_params=pltpu.CompilerParams(
            dimension_semantics=dim_sem,
            vmem_limit_bytes=int(vmem_limit),
        ),
        cost_estimate=cost,
    )(xp, wp, params)

    out = out[:N, :O]
    return out.reshape(orig_shape[:-1] + (O,))


if __name__ == "__main__":
    # Small shapes consistent with the module: batch=2, seq=8, hidden=32.
    batch, seq, hidden = 2, 8, 32
    out_features = hidden  # MLP(hidden_size) default

    key = jax.random.PRNGKey(0)
    kx, kw, kb = jax.random.split(key, 3)

    x = jax.random.normal(kx, (batch, seq, hidden), dtype=jnp.float32)

    # nn.Linear default init: U(-1/sqrt(H), 1/sqrt(H)) for weight and bias.
    bound = 1.0 / (hidden ** 0.5)
    # Weight stored as [H, O] (torch nn.Linear weight transposed).
    weight = jax.random.uniform(kw, (hidden, out_features), jnp.float32,
                                minval=-bound, maxval=bound)
    bias = jax.random.uniform(kb, (out_features,), jnp.float32,
                              minval=-bound, maxval=bound)
    # LayerNorm params: ones / zeros.
    gamma = jnp.ones((out_features,), jnp.float32)
    beta = jnp.zeros((out_features,), jnp.float32)

    y = mlp_forward(x, weight, bias, gamma, beta)
    jax.block_until_ready(y)

    # Pure-JAX f32 reference (kernel matmul runs bf16 -> loosened tolerance).
    ref = x.reshape(-1, hidden) @ weight + bias
    u = ref.mean(-1, keepdims=True)
    s = ((ref - u) ** 2).mean(-1, keepdims=True)
    ref = gamma * ((ref - u) / jnp.sqrt(s + 1e-5)) + beta
    ref = jnp.maximum(ref, 0.0).reshape(batch, seq, out_features)

    assert y.shape == ref.shape
    err = float(jnp.max(jnp.abs(y - ref)))
    assert jnp.allclose(y, ref, atol=5e-2, rtol=5e-2), f"max abs err {err}"

    print("KERNEL_OK")
</pallas_src>

<mosaic_0001>
module attributes {stable_mosaic.version = 11 : i64} {
  func.func @_mlp_kernel_resident(%arg0: i32, %arg1: memref<16x128xf32, #tpu.memory_space<vmem>>, %arg2: memref<128x128xbf16, #tpu.memory_space<vmem>>, %arg3: memref<3x128xf32, #tpu.memory_space<vmem>>, %arg4: memref<16x128xf32, #tpu.memory_space<vmem>>) attributes {dimension_semantics = [#tpu.dimension_semantics<parallel>], iteration_bounds = array<i64: 1>, scalar_prefetch = 0 : i64, scratch_operands = 0 : i64, tpu.core_type = #tpu.core_type<tc>, window_params = [{transform_indices = @transform_0, window_bounds = array<i64: 16, 128>}, {pipeline_mode = #tpu.pipeline_mode<synchronous>, transform_indices = @transform_1, window_bounds = array<i64: 128, 128>}, {pipeline_mode = #tpu.pipeline_mode<synchronous>, transform_indices = @transform_2, window_bounds = array<i64: 3, 128>}, {transform_indices = @transform_3, window_bounds = array<i64: 16, 128>}]} {
    %c0 = arith.constant 0 : index
    %c0_0 = arith.constant 0 : index
    %0 = vector.load %arg1[%c0, %c0_0] : memref<16x128xf32, #tpu.memory_space<vmem>>, vector<16x128xf32>
    %1 = arith.truncf %0 : vector<16x128xf32> to vector<16x128xbf16>
    %c0_1 = arith.constant 0 : index
    %c0_2 = arith.constant 0 : index
    %2 = vector.load %arg2[%c0_1, %c0_2] : memref<128x128xbf16, #tpu.memory_space<vmem>>, vector<128x128xbf16>
    %cst = arith.constant dense<0.000000e+00> : vector<16x128xf32>
    %3 = tpu.matmul %1, %2, %cst {dimension_numbers = #tpu.dot_dimension_numbers<[1], [0], [0], [1], [0, 0, 1, 1], [], []>} : vector<16x128xbf16>, vector<128x128xbf16>, vector<16x128xf32> -> vector<16x128xf32>
    %c0_3 = arith.constant 0 : index
    %c0_4 = arith.constant 0 : index
    %4 = vector.load %arg3[%c0_3, %c0_4] : memref<3x128xf32, #tpu.memory_space<vmem>>, vector<3x128xf32>
    %5 = vector.extract_strided_slice %4 {offsets = [0, 0], sizes = [1, 128], strides = [1, 1]} : vector<3x128xf32> to vector<1x128xf32>
    %6 = vector.extract_strided_slice %4 {offsets = [1, 0], sizes = [1, 128], strides = [1, 1]} : vector<3x128xf32> to vector<1x128xf32>
    %7 = vector.extract_strided_slice %4 {offsets = [2, 0], sizes = [1, 128], strides = [1, 1]} : vector<3x128xf32> to vector<1x128xf32>
    %8 = vector.broadcast %5 : vector<1x128xf32> to vector<16x128xf32>
    %9 = arith.addf %3, %8 : vector<16x128xf32>
    %10 = tpu.iota {dimensions = array<i32: 1>} : vector<16x128xi32>
    %c32_i32 = arith.constant 32 : i32
    %11 = vector.broadcast %c32_i32 : i32 to vector<16x128xi32>
    %12 = arith.cmpi slt, %10, %11 : vector<16x128xi32>
    %cst_5 = arith.constant 0.000000e+00 : f32
    %13 = vector.broadcast %cst_5 : f32 to vector<16x128xf32>
    %14 = arith.select %12, %9, %13 : vector<16x128xi1>, vector<16x128xf32>
    %cst_6 = arith.constant dense<0.000000e+00> : vector<16xf32>
    %15 = vector.multi_reduction <add>, %14, %cst_6 [1] : vector<16x128xf32> to vector<16xf32>
    %16 = vector.shape_cast %15 : vector<16xf32> to vector<16x1xf32>
    %cst_7 = arith.constant 3.125000e-02 : f32
    %17 = vector.broadcast %cst_7 : f32 to vector<16x1xf32>
    %18 = arith.mulf %16, %17 : vector<16x1xf32>
    %19 = vector.broadcast %18 : vector<16x1xf32> to vector<16x128xf32>
    %20 = arith.subf %14, %19 : vector<16x128xf32>
    %cst_8 = arith.constant 0.000000e+00 : f32
    %21 = vector.broadcast %cst_8 : f32 to vector<16x128xf32>
    %22 = arith.select %12, %20, %21 : vector<16x128xi1>, vector<16x128xf32>
    %23 = arith.mulf %22, %22 : vector<16x128xf32>
    %cst_9 = arith.constant dense<0.000000e+00> : vector<16xf32>
    %24 = vector.multi_reduction <add>, %23, %cst_9 [1] : vector<16x128xf32> to vector<16xf32>
    %25 = vector.shape_cast %24 : vector<16xf32> to vector<16x1xf32>
    %cst_10 = arith.constant 3.125000e-02 : f32
    %26 = vector.broadcast %cst_10 : f32 to vector<16x1xf32>
    %27 = arith.mulf %25, %26 : vector<16x1xf32>
    %cst_11 = arith.constant 9.99999974E-6 : f32
    %28 = vector.broadcast %cst_11 : f32 to vector<16x1xf32>
    %29 = arith.addf %27, %28 : vector<16x1xf32>
    %30 = math.rsqrt %29 : vector<16x1xf32>
    %31 = vector.broadcast %30 : vector<16x1xf32> to vector<16x128xf32>
    %32 = arith.mulf %22, %31 : vector<16x128xf32>
    %33 = vector.broadcast %6 : vector<1x128xf32> to vector<16x128xf32>
    %34 = arith.mulf %33, %32 : vector<16x128xf32>
    %35 = vector.broadcast %7 : vector<1x128xf32> to vector<16x128xf32>
    %36 = arith.addf %34, %35 : vector<16x128xf32>
    %cst_12 = arith.constant 0.000000e+00 : f32
    %37 = vector.broadcast %cst_12 : f32 to vector<16x128xf32>
    %38 = arith.maximumf %36, %37 : vector<16x128xf32>
    %c0_13 = arith.constant 0 : index
    %c0_14 = arith.constant 0 : index
    %39 = vector.load %arg4[%c0_13, %c0_14] : memref<16x128xf32, #tpu.memory_space<vmem>>, vector<16x128xf32>
    tpu.vector_store %arg4[%c0_13, %c0_14], %38 {strides = array<i32>} : memref<16x128xf32, #tpu.memory_space<vmem>>, vector<16x128xf32>,
    return
  }
  func.func @transform_0(%arg0: i32) -> (i32, i32) {
    %c0_i32 = arith.constant 0 : i32
    %c0_i32_0 = arith.constant 0 : i32
    return %arg0, %c0_i32 : i32, i32
  }
  func.func @transform_1(%arg0: i32) -> (i32, i32) {
    %c0_i32 = arith.constant 0 : i32
    %c0_i32_0 = arith.constant 0 : i32
    %c0_i32_1 = arith.constant 0 : i32
    return %c0_i32, %c0_i32_0 : i32, i32
  }
  func.func @transform_2(%arg0: i32) -> (i32, i32) {
    %c0_i32 = arith.constant 0 : i32
    %c0_i32_0 = arith.constant 0 : i32
    %c0_i32_1 = arith.constant 0 : i32
    return %c0_i32, %c0_i32_0 : i32, i32
  }
  func.func @transform_3(%arg0: i32) -> (i32, i32) {
    %c0_i32 = arith.constant 0 : i32
    %c0_i32_0 = arith.constant 0 : i32
    return %arg0, %c0_i32 : i32, i32
  }
}

</mosaic_0001>

<llo_original>
// kernel: tpu_custom_call.1
$region0: #{tpu_custom_call.1}
  #allocation0 [shape = 'u32[]', space=smem, size = 0x4, offset = 0x4, fixed_abs, tag = 'smem constant byte address 0x4 - core index']
  #allocation1 [shape = 'u32[72,128]{1,0:T(1,128)}', space=vmem, size = 0x9000, scoped, tag = 'internal scratch']
  %s0 = inlined_call_operand.hbm [shape: f32[16,128], index: 0, kind: input, shape index: {}]
  %s1 = inlined_call_operand.hbm [shape: bf16[128,128], index: 1, kind: input, shape index: {}]
  %s2 = inlined_call_operand.hbm [shape: f32[3,128], index: 2, kind: input, shape index: {}]
  %s3 = inlined_call_operand.hbm [shape: f32[16,128], index: 3, kind: output, shape index: {}]
  %s4 = sld [smem:[#allocation0]]
  $region34: #{tpu_custom_call.1} parent=0
    _
  %s6 = ssub.s32 1, %s4
  %s7 = scalar_select 0, %s6, %s4
  $region1: #{tpu_custom_call.1} parent=0
    #allocation2 [shape = 'u8[8192]{0}', space=vmem, size = 0x2000, scoped, tag = 'input window, operand 0, single buffered']
    #allocation3 [shape = 's32[1]{0}', space=sflag, size = 0x4, scoped, tag = 'scoped memory for tpu_custom_call.1']
    #allocation4 [shape = 's32[1]{0}', space=sflag, size = 0x4, scoped, tag = 'scoped memory for tpu_custom_call.1']
    #allocation5 [shape = 'u8[32768]{0}', space=vmem, size = 0x8000, scoped, tag = 'input window, operand 1, single buffered']
    #allocation6 [shape = 's32[1]{0}', space=sflag, size = 0x4, scoped, tag = 'scoped memory for tpu_custom_call.1']
    #allocation7 [shape = 'u8[2048]{0}', space=vmem, size = 0x800, scoped, tag = 'input window, operand 2, single buffered']
    #allocation8 [shape = 'u8[8192]{0}', space=vmem, size = 0x2000, scoped, tag = 'output window, operand 0, single buffered']
    %8 = vsyncpa [#allocation3], 0
    %9 = vsyncpa [#allocation6], 0
    %10 = vsyncpa [#allocation4], 0
    // Predicated region
    $region2: #{tpu_custom_call.1} parent=1 // pred_check
      _
    $region3: #{tpu_custom_call.1} parent=1 // pred_check_branch
      %12 = sbr.rel (0) target = $region5
    $region4: #{tpu_custom_call.1} parent=1 // pred_region
      %14 = vsyncadd [#allocation3], 0
      %s15 = sshll.u32 %s0, 4
      %s16 = int_to_ptr.hbm [resolvable:$true] %s15
      %s17 = sshll.u32 [#allocation2], 4
      %s18 = int_to_ptr.vmem [resolvable:$true] %s17
      %23 = dma.hbm_to_vmem [thread:$0]  %s16, 256, %s18, [#allocation3], 128, 128, 8
    $region5: #{tpu_custom_call.1} parent=1 // pred_fallthru
      _
    // Predicated region
    $region6: #{tpu_custom_call.1} parent=1 // pred_check
      _
    $region7: #{tpu_custom_call.1} parent=1 // pred_check_branch
      %25 = sbr.rel (0) target = $region9
    $region8: #{tpu_custom_call.1} parent=1 // pred_region
      %27 = vsyncadd [#allocation6], 0
      %s28 = sshll.u32 %s1, 4
      %s29 = int_to_ptr.hbm [resolvable:$true] %s28
      %s30 = sshll.u32 [#allocation5], 4
      %s31 = int_to_ptr.vmem [resolvable:$true] %s30
      %36 = dma.hbm_to_vmem [thread:$0]  %s29, 1024, %s31, [#allocation6], 64, 64, 4
    $region9: #{tpu_custom_call.1} parent=1 // pred_fallthru
      _
    // Predicated region
    $region10: #{tpu_custom_call.1} parent=1 // pred_check
      _
    $region11: #{tpu_custom_call.1} parent=1 // pred_check_branch
      %38 = sbr.rel (0) target = $region13
    $region12: #{tpu_custom_call.1} parent=1 // pred_region
      %40 = vsyncadd [#allocation6], 0
      %s42 = sshll.u32 %s2, 4
      %s43 = int_to_ptr.hbm [resolvable:$true] %s42
      %s44 = sshll.u32 [#allocation7], 4
      %s45 = int_to_ptr.vmem [resolvable:$true] %s44
      %47 = dma.hbm_to_vmem [thread:$0]  %s43, 64, %s45, [#allocation6]
    $region13: #{tpu_custom_call.1} parent=1 // pred_fallthru
      _
    // Predicated region
    $region14: #{tpu_custom_call.1} parent=1 // pred_check
      _
    $region15: #{tpu_custom_call.1} parent=1 // pred_check_branch
      %49 = sbr.rel (0) target = $region17
    $region16: #{tpu_custom_call.1} parent=1 // pred_region
      %51 = dma.done [#allocation3], 256
    $region17: #{tpu_custom_call.1} parent=1 // pred_fallthru
      _
    // Predicated region
    $region18: #{tpu_custom_call.1} parent=1 // pred_check
      _
    $region19: #{tpu_custom_call.1} parent=1 // pred_check_branch
      %53 = sbr.rel (0) target = $region21
    $region20: #{tpu_custom_call.1} parent=1 // pred_region
      %55 = dma.done [#allocation6], 1024
    $region21: #{tpu_custom_call.1} parent=1 // pred_fallthru
      _
    // Predicated region
    $region22: #{tpu_custom_call.1} parent=1 // pred_check
      _
    $region23: #{tpu_custom_call.1} parent=1 // pred_check_branch
      %57 = sbr.rel (0) target = $region25
    $region24: #{tpu_custom_call.1} parent=1 // pred_region
      %59 = dma.done [#allocation6], 64
    $region25: #{tpu_custom_call.1} parent=1 // pred_fallthru
      _
    %v60 = vld [vmem:[#allocation2] sm:$0xff]
    %v61 = vld [vmem:[#allocation2 + $0x8] sm:$0xff]
    %v62 = vpack.c.bf16 %v61, %v60
    %v63 = vld [vmem:[#allocation5] sm:$0xf]
    %v64 = vld [vmem:[#allocation5 + $0x4] sm:$0xf]
    %v65 = vld [vmem:[#allocation5 + $0x8] sm:$0xf]
    %v66 = vld [vmem:[#allocation5 + $0xc] sm:$0xf]
    %v67 = vld [vmem:[#allocation5 + $0x10] sm:$0xf]
    %v68 = vld [vmem:[#allocation5 + $0x14] sm:$0xf]
    %v69 = vld [vmem:[#allocation5 + $0x18] sm:$0xf]
    %v70 = vld [vmem:[#allocation5 + $0x1c] sm:$0xf]
    %v71 = vld [vmem:[#allocation5 + $0x20] sm:$0xf]
    %v72 = vld [vmem:[#allocation5 + $0x24] sm:$0xf]
    %v73 = vld [vmem:[#allocation5 + $0x28] sm:$0xf]
    %v74 = vld [vmem:[#allocation5 + $0x2c] sm:$0xf]
    %v75 = vld [vmem:[#allocation5 + $0x30] sm:$0xf]
    %v76 = vld [vmem:[#allocation5 + $0x34] sm:$0xf]
    %v77 = vld [vmem:[#allocation5 + $0x38] sm:$0xf]
    %v78 = vld [vmem:[#allocation5 + $0x3c] sm:$0xf]
    %v79 = vld [vmem:[#allocation7] sm:$0x7]
    %v80 = vperm.slane %v79, 0
    %v97 = vunpack.c.l.b16 %v63
    %v98 = vunpack.c.l.b16 %v64
    %v99 = vunpack.c.l.b16 %v65
    %v100 = vunpack.c.l.b16 %v66
    %v101 = vunpack.c.l.b16 %v67
    %v102 = vunpack.c.l.b16 %v68
    %v103 = vunpack.c.l.b16 %v69
    %v104 = vunpack.c.l.b16 %v70
    %v105 = vunpack.c.l.b16 %v71
    %v106 = vunpack.c.l.b16 %v72
    %v107 = vunpack.c.l.b16 %v73
    %v108 = vunpack.c.l.b16 %v74
    %v109 = vunpack.c.l.b16 %v75
    %v110 = vunpack.c.l.b16 %v76
    %v111 = vunpack.c.l.b16 %v77
    %v112 = vunpack.c.l.b16 %v78
    %v113 = vpack.c.b16 %v98, %v97
    %v114 = vpack.c.b16 %v100, %v99
    %v115 = vpack.c.b16 %v102, %v101
    %v116 = vpack.c.b16 %v104, %v103
    %v117 = vpack.c.b16 %v106, %v105
    %v118 = vpack.c.b16 %v108, %v107
    %v119 = vpack.c.b16 %v110, %v109
    %v120 = vpack.c.b16 %v112, %v111
    %129 = vmatpush.bf16.msra.mxu0 %v120
    %130 = vmatpush.bf16.msra.mxu0 %v119
    %131 = vmatpush.bf16.msra.mxu0 %v118
    %132 = vmatpush.bf16.msra.mxu0 %v117
    %133 = vmatpush.bf16.msra.mxu0 %v116
    %134 = vmatpush.bf16.msra.mxu0 %v115
    %135 = vmatpush.bf16.msra.mxu0 %v114
    %136 = vmatpush.bf16.msra.mxu0 %v113
    %137 = vmatmul.bf16.gmra.mxu0 %v62
    %v138 = vpop.f32.mrf.mxu0
    %v139 = vadd.f32 %v80, %v138
    %v140 = vpop.f32.mrf.mxu0
    %v141 = vadd.f32 %v80, %v140
    %142 = vdwg.mxu0
    %v143 = vlaneseq
    %v144 = vand.u32 %v143, 127
    %vm145 = vcmp.lt.s32.totalorder %v144, 32
    %v146 = vsel %vm145, %v139, 0.0
    %v147 = vsel %vm145, %v141, 0.0
    %148 = vadd.xlane.f32.xlu0 %v146
    %v149 = vpop.xlane.xlu0 %148
    %150 = vadd.xlane.f32.xlu0 %v147
    %v151 = vpop.xlane.xlu0 %150
    %v152 = vmul.f32 %v149, 0.03125
    %v153 = vmul.f32 %v151, 0.03125
    %v154 = vsub.f32 %v146, %v152
    %v155 = vsub.f32 %v147, %v153
    %v156 = vsel %vm145, %v154, 0.0
    %v157 = vsel %vm145, %v155, 0.0
    %v158 = vmul.f32 %v156, %v156
    %v159 = vmul.f32 %v157, %v157
    %160 = vadd.xlane.f32.xlu0 %v158
    %v161 = vpop.xlane.xlu0 %160
    %162 = vadd.xlane.f32.xlu0 %v159
    %v163 = vpop.xlane.xlu0 %162
    %v164 = vmul.f32 %v161, 0.03125
    %v165 = vmul.f32 %v163, 0.03125
    %v166 = vadd.f32 %v164, 1e-05
    %v167 = vadd.f32 %v165, 1e-05
    %v168 = vrsqrt.pop %v166
    %v169 = vmul.f32 %v168, %v166
    %v170 = vmul.f32 %v169, %v168
    %v171 = vmul.f32 0.5, %v170
    %v172 = vsub.f32 1.5, %v171
    %v173 = vmul.f32 %v168, %v172
    %vm174 = vweird.f32 %v166
    %vm175 = vweird.f32 %v168
    %vm176 = vmor %vm174, %vm175
    %v177 = vsel %vm176, %v168, %v173
    %v178 = vrsqrt.pop %v167
    %v179 = vmul.f32 %v178, %v167
    %v180 = vmul.f32 %v179, %v178
    %v181 = vmul.f32 0.5, %v180
    %v182 = vsub.f32 1.5, %v181
    %v183 = vmul.f32 %v178, %v182
    %vm184 = vweird.f32 %v167
    %vm185 = vweird.f32 %v178
    %vm186 = vmor %vm184, %vm185
    %v187 = vsel %vm186, %v178, %v183
    %v188 = vmul.f32 %v156, %v177
    %v189 = vmul.f32 %v157, %v187
    %v190 = vperm.slane %v79, 1
    %v191 = vmul.f32 %v190, %v188
    %v192 = vmul.f32 %v190, %v189
    %v193 = vperm.slane %v79, 2
    %v194 = vadd.f32 %v191, %v193
    %v195 = vadd.f32 %v192, %v193
    %v196 = vmax.f32 %v194, 0.0
    %v197 = vmax.f32 %v195, 0.0
    %198 = vst [vmem:[#allocation8] sm:$0xff] %v196
    %199 = vst [vmem:[#allocation8 + $0x8] sm:$0xff] %v197
    // Predicated region
    $region26: #{tpu_custom_call.1} parent=1 // pred_check
      _
    $region27: #{tpu_custom_call.1} parent=1 // pred_check_branch
      %201 = sbr.rel (0) target = $region29
    $region28: #{tpu_custom_call.1} parent=1 // pred_region
      %203 = vsyncadd [#allocation4], 0
      %s204 = sshll.u32 [#allocation8], 4
      %s205 = int_to_ptr.vmem [resolvable:$true] %s204
      %s206 = sshll.u32 %s3, 4
      %s207 = int_to_ptr.hbm [resolvable:$true] %s206
      %212 = dma.vmem_to_hbm [thread:$0]  %s205, 256, %s207, [#allocation4], 128, 128, 8
    $region29: #{tpu_custom_call.1} parent=1 // pred_fallthru
      _
    // Predicated region
    $region30: #{tpu_custom_call.1} parent=1 // pred_check
      _
    $region31: #{tpu_custom_call.1} parent=1 // pred_check_branch
      %214 = sbr.rel (0) target = $region33
    $region32: #{tpu_custom_call.1} parent=1 // pred_region
      %216 = dma.done [#allocation4], 256
    $region33: #{tpu_custom_call.1} parent=1 // pred_fallthru
      _
    %217 = vsyncpa [#allocation3], 1
    %218 = vsyncpa [#allocation6], 1
    %219 = vsyncpa [#allocation4], 1

</llo_original>
